<compile_context>
chip_gen: v5e
topology: v5e:2x2
jax: 0.10.0
libtpu: 0.0.40
codegen_flags: <defaults>
</compile_context>

<pallas_src>
import jax
import jax.numpy as jnp
from jax.experimental import pallas as pl
from jax.experimental.pallas import tpu as pltpu

HIDDEN1 = 128
HIDDEN2 = 64


def _round_up(n, m):
    return ((n + m - 1) // m) * m


def _nfsp_kernel(x_ref, w1_ref, b1_ref, w2_ref, b2_ref, w3_ref, b3_ref, o_ref):
    # Layer 1: (TB, F) bf16 @ (F, 128) bf16 -> f32 acc, +bias, ReLU
    h1 = jnp.dot(x_ref[...], w1_ref[...], preferred_element_type=jnp.float32)
    h1 = jnp.maximum(h1 + b1_ref[...], 0.0)
    # Layer 2: (TB, 128) @ (128, 64) -> f32 acc, +bias, ReLU
    h2 = jnp.dot(h1.astype(jnp.bfloat16), w2_ref[...],
                 preferred_element_type=jnp.float32)
    h2 = jnp.maximum(h2 + b2_ref[...], 0.0)
    # Head: (TB, 64) @ (64, O_pad) -> f32 acc, +bias (lane-dense O_pad = 128k)
    out = jnp.dot(h2.astype(jnp.bfloat16), w3_ref[...],
                  preferred_element_type=jnp.float32)
    o_ref[...] = (out + b3_ref[...]).astype(o_ref.dtype)


def nfsp_forward(x, params, *, block_batch=1024):
    """Fused forward pass of NFSPNetwork.

    x: (batch, input_features) float32
    params: dict with w1 (F,128), b1 (1,128), w2 (128,64), b2 (1,64),
            w3 (64,O), b3 (1,O)   (weights stored (in, out) so y = x @ W + b)
    returns: (batch, outputs) float32
    """
    batch, feat = x.shape
    outputs = params["w3"].shape[1]

    # --- Lane-dense head: pad output width to a multiple of 128. ---
    out_pad = _round_up(max(outputs, 1), 128)
    w3 = params["w3"]
    b3 = params["b3"]
    if out_pad != outputs:
        w3 = jnp.pad(w3, ((0, 0), (0, out_pad - outputs)))
        b3 = jnp.pad(b3, ((0, 0), (0, out_pad - outputs)))

    # --- bf16 activations/weights (halves HBM traffic), f32 biases. ---
    xb = x.astype(jnp.bfloat16)
    w1 = params["w1"].astype(jnp.bfloat16)
    w2 = params["w2"].astype(jnp.bfloat16)
    w3 = w3.astype(jnp.bfloat16)
    b1 = params["b1"].astype(jnp.float32)
    b2 = params["b2"].astype(jnp.float32)
    b3 = b3.astype(jnp.float32)

    # --- Batch tiling: tile multiple of 16 sublanes (bf16 packing), pad tail. ---
    tb = min(block_batch, _round_up(batch, 16))
    tb = _round_up(tb, 16)
    batch_pad = _round_up(batch, tb)
    if batch_pad != batch:
        xb = jnp.pad(xb, ((0, batch_pad - batch), (0, 0)))
    grid = (batch_pad // tb,)

    # --- VMEM budget: 2x double-buffered x/out tiles + resident weights. ---
    weight_bytes = 2 * (w1.size + w2.size + w3.size) + 4 * (b1.size + b2.size + b3.size)
    act_bytes = 2 * (tb * feat * 2 + tb * out_pad * 4)
    vmem_limit = int(weight_bytes + act_bytes + (4 << 20))
    vmem_limit = max(vmem_limit, 16 << 20)
    vmem_limit = min(vmem_limit, 48 << 20)  # safe on v5e/v6e (128 MiB) and v7x (64 MiB)

    flops = 2 * batch_pad * (feat * HIDDEN1 + HIDDEN1 * HIDDEN2 + HIDDEN2 * out_pad)
    bytes_accessed = batch_pad * feat * 2 + batch_pad * out_pad * 4 + weight_bytes
    cost = pl.CostEstimate(flops=int(flops), transcendentals=0,
                           bytes_accessed=int(bytes_accessed))

    out = pl.pallas_call(
        _nfsp_kernel,
        out_shape=jax.ShapeDtypeStruct((batch_pad, out_pad), jnp.float32),
        grid=grid,
        in_specs=[
            pl.BlockSpec((tb, feat), lambda i: (i, 0)),       # x: tiled over batch
            pl.BlockSpec(w1.shape, lambda i: (0, 0)),         # weights/biases resident
            pl.BlockSpec(b1.shape, lambda i: (0, 0)),
            pl.BlockSpec(w2.shape, lambda i: (0, 0)),
            pl.BlockSpec(b2.shape, lambda i: (0, 0)),
            pl.BlockSpec(w3.shape, lambda i: (0, 0)),
            pl.BlockSpec(b3.shape, lambda i: (0, 0)),
        ],
        out_specs=pl.BlockSpec((tb, out_pad), lambda i: (i, 0)),
        compiler_params=pltpu.CompilerParams(
            dimension_semantics=("parallel",),
            vmem_limit_bytes=vmem_limit,
        ),
        cost_estimate=cost,
    )(xb, w1, b1, w2, b2, w3, b3)

    return out[:batch, :outputs]


def init_params(key, input_features, outputs):
    """Deterministic init mimicking PyTorch Linear default (U[-1/sqrt(fan_in), +])."""
    ks = jax.random.split(key, 6)

    def lin(kw, kb, fan_in, fan_out):
        bound = 1.0 / jnp.sqrt(jnp.float32(fan_in))
        w = jax.random.uniform(kw, (fan_in, fan_out), jnp.float32, -bound, bound)
        b = jax.random.uniform(kb, (1, fan_out), jnp.float32, -bound, bound)
        return w, b

    w1, b1 = lin(ks[0], ks[1], input_features, HIDDEN1)
    w2, b2 = lin(ks[2], ks[3], HIDDEN1, HIDDEN2)
    w3, b3 = lin(ks[4], ks[5], HIDDEN2, outputs)
    return {"w1": w1, "b1": b1, "w2": w2, "b2": b2, "w3": w3, "b3": b3}


def _reference(x, p):
    """Reference with the same bf16-input / f32-accumulate precision as the kernel."""
    xb = x.astype(jnp.bfloat16)
    w1 = p["w1"].astype(jnp.bfloat16)
    w2 = p["w2"].astype(jnp.bfloat16)
    w3 = p["w3"].astype(jnp.bfloat16)
    h1 = jnp.maximum(jnp.dot(xb, w1, preferred_element_type=jnp.float32) + p["b1"], 0.0)
    h2 = jnp.maximum(jnp.dot(h1.astype(jnp.bfloat16), w2,
                             preferred_element_type=jnp.float32) + p["b2"], 0.0)
    return jnp.dot(h2.astype(jnp.bfloat16), w3,
                   preferred_element_type=jnp.float32) + p["b3"]


if __name__ == "__main__":
    key = jax.random.PRNGKey(0)
    k_x, k_p = jax.random.split(key)

    batch = 8
    input_features = 32
    outputs = 8

    x = jax.random.normal(k_x, (batch, input_features), jnp.float32)
    params = init_params(k_p, input_features, outputs)

    out = nfsp_forward(x, params)
    out = jax.block_until_ready(out)

    ref = _reference(x, params)
    assert out.shape == (batch, outputs)
    assert jnp.allclose(out, ref, atol=1e-2, rtol=1e-2), (
        f"max abs err {jnp.max(jnp.abs(out - ref))}")

    print("KERNEL_OK")
</pallas_src>

<mosaic_0001>
module attributes {stable_mosaic.version = 11 : i64} {
  func.func @_nfsp_kernel(%arg0: i32, %arg1: memref<16x32xbf16, #tpu.memory_space<vmem>>, %arg2: memref<32x128xbf16, #tpu.memory_space<vmem>>, %arg3: memref<1x128xf32, #tpu.memory_space<vmem>>, %arg4: memref<128x64xbf16, #tpu.memory_space<vmem>>, %arg5: memref<1x64xf32, #tpu.memory_space<vmem>>, %arg6: memref<64x128xbf16, #tpu.memory_space<vmem>>, %arg7: memref<1x128xf32, #tpu.memory_space<vmem>>, %arg8: memref<16x128xf32, #tpu.memory_space<vmem>>) attributes {dimension_semantics = [#tpu.dimension_semantics<parallel>], iteration_bounds = array<i64: 1>, scalar_prefetch = 0 : i64, scratch_operands = 0 : i64, tpu.core_type = #tpu.core_type<tc>, window_params = [{transform_indices = @transform_0, window_bounds = array<i64: 16, 32>}, {pipeline_mode = #tpu.pipeline_mode<synchronous>, transform_indices = @transform_1, window_bounds = array<i64: 32, 128>}, {pipeline_mode = #tpu.pipeline_mode<synchronous>, transform_indices = @transform_2, window_bounds = array<i64: 1, 128>}, {pipeline_mode = #tpu.pipeline_mode<synchronous>, transform_indices = @transform_3, window_bounds = array<i64: 128, 64>}, {pipeline_mode = #tpu.pipeline_mode<synchronous>, transform_indices = @transform_4, window_bounds = array<i64: 1, 64>}, {pipeline_mode = #tpu.pipeline_mode<synchronous>, transform_indices = @transform_5, window_bounds = array<i64: 64, 128>}, {pipeline_mode = #tpu.pipeline_mode<synchronous>, transform_indices = @transform_6, window_bounds = array<i64: 1, 128>}, {transform_indices = @transform_7, window_bounds = array<i64: 16, 128>}]} {
    %c0 = arith.constant 0 : index
    %c0_0 = arith.constant 0 : index
    %0 = vector.load %arg1[%c0, %c0_0] : memref<16x32xbf16, #tpu.memory_space<vmem>>, vector<16x32xbf16>
    %c0_1 = arith.constant 0 : index
    %c0_2 = arith.constant 0 : index
    %1 = vector.load %arg2[%c0_1, %c0_2] : memref<32x128xbf16, #tpu.memory_space<vmem>>, vector<32x128xbf16>
    %cst = arith.constant dense<0.000000e+00> : vector<16x128xf32>
    %2 = tpu.matmul %0, %1, %cst {dimension_numbers = #tpu.dot_dimension_numbers<[1], [0], [0], [1], [0, 0, 1, 1], [], []>} : vector<16x32xbf16>, vector<32x128xbf16>, vector<16x128xf32> -> vector<16x128xf32>
    %c0_3 = arith.constant 0 : index
    %c0_4 = arith.constant 0 : index
    %3 = vector.load %arg3[%c0_3, %c0_4] : memref<1x128xf32, #tpu.memory_space<vmem>>, vector<1x128xf32>
    %4 = vector.broadcast %3 : vector<1x128xf32> to vector<16x128xf32>
    %5 = arith.addf %2, %4 : vector<16x128xf32>
    %cst_5 = arith.constant 0.000000e+00 : f32
    %6 = vector.broadcast %cst_5 : f32 to vector<16x128xf32>
    %7 = arith.maximumf %5, %6 : vector<16x128xf32>
    %8 = arith.truncf %7 : vector<16x128xf32> to vector<16x128xbf16>
    %c0_6 = arith.constant 0 : index
    %c0_7 = arith.constant 0 : index
    %9 = vector.load %arg4[%c0_6, %c0_7] : memref<128x64xbf16, #tpu.memory_space<vmem>>, vector<128x64xbf16>
    %cst_8 = arith.constant dense<0.000000e+00> : vector<16x64xf32>
    %10 = tpu.matmul %8, %9, %cst_8 {dimension_numbers = #tpu.dot_dimension_numbers<[1], [0], [0], [1], [0, 0, 1, 1], [], []>} : vector<16x128xbf16>, vector<128x64xbf16>, vector<16x64xf32> -> vector<16x64xf32>
    %c0_9 = arith.constant 0 : index
    %c0_10 = arith.constant 0 : index
    %11 = vector.load %arg5[%c0_9, %c0_10] : memref<1x64xf32, #tpu.memory_space<vmem>>, vector<1x64xf32>
    %12 = vector.broadcast %11 : vector<1x64xf32> to vector<16x64xf32>
    %13 = arith.addf %10, %12 : vector<16x64xf32>
    %cst_11 = arith.constant 0.000000e+00 : f32
    %14 = vector.broadcast %cst_11 : f32 to vector<16x64xf32>
    %15 = arith.maximumf %13, %14 : vector<16x64xf32>
    %16 = arith.truncf %15 : vector<16x64xf32> to vector<16x64xbf16>
    %c0_12 = arith.constant 0 : index
    %c0_13 = arith.constant 0 : index
    %17 = vector.load %arg6[%c0_12, %c0_13] : memref<64x128xbf16, #tpu.memory_space<vmem>>, vector<64x128xbf16>
    %cst_14 = arith.constant dense<0.000000e+00> : vector<16x128xf32>
    %18 = tpu.matmul %16, %17, %cst_14 {dimension_numbers = #tpu.dot_dimension_numbers<[1], [0], [0], [1], [0, 0, 1, 1], [], []>} : vector<16x64xbf16>, vector<64x128xbf16>, vector<16x128xf32> -> vector<16x128xf32>
    %c0_15 = arith.constant 0 : index
    %c0_16 = arith.constant 0 : index
    %19 = vector.load %arg7[%c0_15, %c0_16] : memref<1x128xf32, #tpu.memory_space<vmem>>, vector<1x128xf32>
    %20 = vector.broadcast %19 : vector<1x128xf32> to vector<16x128xf32>
    %21 = arith.addf %18, %20 : vector<16x128xf32>
    %c0_17 = arith.constant 0 : index
    %c0_18 = arith.constant 0 : index
    %22 = vector.load %arg8[%c0_17, %c0_18] : memref<16x128xf32, #tpu.memory_space<vmem>>, vector<16x128xf32>
    tpu.vector_store %arg8[%c0_17, %c0_18], %21 {strides = array<i32>} : memref<16x128xf32, #tpu.memory_space<vmem>>, vector<16x128xf32>,
    return
  }
  func.func @transform_0(%arg0: i32) -> (i32, i32) {
    %c0_i32 = arith.constant 0 : i32
    %c0_i32_0 = arith.constant 0 : i32
    return %arg0, %c0_i32 : i32, i32
  }
  func.func @transform_1(%arg0: i32) -> (i32, i32) {
    %c0_i32 = arith.constant 0 : i32
    %c0_i32_0 = arith.constant 0 : i32
    %c0_i32_1 = arith.constant 0 : i32
    return %c0_i32, %c0_i32_0 : i32, i32
  }
  func.func @transform_2(%arg0: i32) -> (i32, i32) {
    %c0_i32 = arith.constant 0 : i32
    %c0_i32_0 = arith.constant 0 : i32
    %c0_i32_1 = arith.constant 0 : i32
    return %c0_i32, %c0_i32_0 : i32, i32
  }
  func.func @transform_3(%arg0: i32) -> (i32, i32) {
    %c0_i32 = arith.constant 0 : i32
    %c0_i32_0 = arith.constant 0 : i32
    %c0_i32_1 = arith.constant 0 : i32
    return %c0_i32, %c0_i32_0 : i32, i32
  }
  func.func @transform_4(%arg0: i32) -> (i32, i32) {
    %c0_i32 = arith.constant 0 : i32
    %c0_i32_0 = arith.constant 0 : i32
    %c0_i32_1 = arith.constant 0 : i32
    return %c0_i32, %c0_i32_0 : i32, i32
  }
  func.func @transform_5(%arg0: i32) -> (i32, i32) {
    %c0_i32 = arith.constant 0 : i32
    %c0_i32_0 = arith.constant 0 : i32
    %c0_i32_1 = arith.constant 0 : i32
    return %c0_i32, %c0_i32_0 : i32, i32
  }
  func.func @transform_6(%arg0: i32) -> (i32, i32) {
    %c0_i32 = arith.constant 0 : i32
    %c0_i32_0 = arith.constant 0 : i32
    %c0_i32_1 = arith.constant 0 : i32
    return %c0_i32, %c0_i32_0 : i32, i32
  }
  func.func @transform_7(%arg0: i32) -> (i32, i32) {
    %c0_i32 = arith.constant 0 : i32
    %c0_i32_0 = arith.constant 0 : i32
    return %arg0, %c0_i32 : i32, i32
  }
}

</mosaic_0001>

<llo_original>
// kernel: tpu_custom_call.1
$region0: #{tpu_custom_call.1}
  #allocation0 [shape = 'u32[]', space=smem, size = 0x4, offset = 0x4, fixed_abs, tag = 'smem constant byte address 0x4 - core index']
  #allocation1 [shape = 'u32[72,128]{1,0:T(1,128)}', space=vmem, size = 0x9000, scoped, tag = 'internal scratch']
  %s0 = inlined_call_operand.vmem [shape: bf16[16,32], index: 0, kind: input, shape index: {}]
  %s1 = inlined_call_operand.vmem [shape: bf16[32,128], index: 1, kind: input, shape index: {}]
  %s2 = inlined_call_operand.vmem [shape: f32[1,128], index: 2, kind: input, shape index: {}]
  %s3 = inlined_call_operand.vmem [shape: bf16[128,64], index: 3, kind: input, shape index: {}]
  %s4 = inlined_call_operand.vmem [shape: f32[1,64], index: 4, kind: input, shape index: {}]
  %s5 = inlined_call_operand.vmem [shape: bf16[64,128], index: 5, kind: input, shape index: {}]
  %s6 = inlined_call_operand.vmem [shape: f32[1,128], index: 6, kind: input, shape index: {}]
  %s7 = inlined_call_operand.hbm [shape: f32[16,128], index: 7, kind: output, shape index: {}]
  %s8 = sld [smem:[#allocation0]]
  $region38: #{tpu_custom_call.1} parent=0
    _
  %s10 = ssub.s32 1, %s8
  %s11 = scalar_select 0, %s10, %s8
  $region1: #{tpu_custom_call.1} parent=0
    #allocation2 [shape = 'u8[8192]{0}', space=vmem, size = 0x2000, scoped, tag = 'output window, operand 0, single buffered']
    #allocation3 [shape = 's32[1]{0}', space=sflag, size = 0x4, scoped, tag = 'scoped memory for tpu_custom_call.1']
    %12 = vsyncpa [#allocation3], 0
    // Predicated region
    $region2: #{tpu_custom_call.1} parent=1 // pred_check
      _
    $region3: #{tpu_custom_call.1} parent=1 // pred_check_branch
      %14 = sbr.rel (0) target = $region5
    $region4: #{tpu_custom_call.1} parent=1 // pred_region
      _
    $region5: #{tpu_custom_call.1} parent=1 // pred_fallthru
      _
    // Predicated region
    $region6: #{tpu_custom_call.1} parent=1 // pred_check
      _
    $region7: #{tpu_custom_call.1} parent=1 // pred_check_branch
      %16 = sbr.rel (0) target = $region9
    $region8: #{tpu_custom_call.1} parent=1 // pred_region
      _
    $region9: #{tpu_custom_call.1} parent=1 // pred_fallthru
      _
    // Predicated region
    $region10: #{tpu_custom_call.1} parent=1 // pred_check
      _
    $region11: #{tpu_custom_call.1} parent=1 // pred_check_branch
      %18 = sbr.rel (0) target = $region13
    $region12: #{tpu_custom_call.1} parent=1 // pred_region
      _
    $region13: #{tpu_custom_call.1} parent=1 // pred_fallthru
      _
    // Predicated region
    $region14: #{tpu_custom_call.1} parent=1 // pred_check
      _
    $region15: #{tpu_custom_call.1} parent=1 // pred_check_branch
      %20 = sbr.rel (0) target = $region17
    $region16: #{tpu_custom_call.1} parent=1 // pred_region
      _
    $region17: #{tpu_custom_call.1} parent=1 // pred_fallthru
      _
    // Predicated region
    $region18: #{tpu_custom_call.1} parent=1 // pred_check
      _
    $region19: #{tpu_custom_call.1} parent=1 // pred_check_branch
      %22 = sbr.rel (0) target = $region21
    $region20: #{tpu_custom_call.1} parent=1 // pred_region
      _
    $region21: #{tpu_custom_call.1} parent=1 // pred_fallthru
      _
    // Predicated region
    $region22: #{tpu_custom_call.1} parent=1 // pred_check
      _
    $region23: #{tpu_custom_call.1} parent=1 // pred_check_branch
      %24 = sbr.rel (0) target = $region25
    $region24: #{tpu_custom_call.1} parent=1 // pred_region
      _
    $region25: #{tpu_custom_call.1} parent=1 // pred_fallthru
      _
    // Predicated region
    $region26: #{tpu_custom_call.1} parent=1 // pred_check
      _
    $region27: #{tpu_custom_call.1} parent=1 // pred_check_branch
      %26 = sbr.rel (0) target = $region29
    $region28: #{tpu_custom_call.1} parent=1 // pred_region
      _
    $region29: #{tpu_custom_call.1} parent=1 // pred_fallthru
      _
    %v28 = vld [vmem:[%s0] sm:$0xf]
    %v29 = vld [vmem:[%s0 + $0x4] sm:$0xf]
    %v30 = vld [vmem:[%s1] sm:$0xf]
    %v31 = vld [vmem:[%s1 + $0x4] sm:$0xf]
    %v32 = vld [vmem:[%s1 + $0x8] sm:$0xf]
    %v33 = vld [vmem:[%s1 + $0xc] sm:$0xf]
    %v34 = vld [vmem:[%s2] sm:$0x1]
    %v36 = vperm.slane %v34, 0
    %v40 = vunpack.c.l.b16 %v28
    %v41 = vunpack.c.l.b16 %v29
    %v42 = vpack.c.b16 %v41, %v40
    %v47 = vunpack.c.l.b16 %v30
    %v48 = vunpack.c.l.b16 %v31
    %v49 = vunpack.c.l.b16 %v32
    %v50 = vunpack.c.l.b16 %v33
    %v51 = vpack.c.b16 %v48, %v47
    %v52 = vpack.c.b16 %v50, %v49
    %vm55 = vcmask 261120
    %v57 = vsel %vm55, %v42, 0
    %59 = vmatpush.bf16.msra.mxu0 0
    %60 = vmatpush.bf16.msra.mxu0 0
    %61 = vmatpush.bf16.msra.mxu0 0
    %62 = vmatpush.bf16.msra.mxu0 0
    %63 = vmatpush.bf16.msra.mxu0 0
    %64 = vmatpush.bf16.msra.mxu0 0
    %65 = vmatpush.bf16.msra.mxu0 %v52
    %66 = vmatpush.bf16.msra.mxu0 %v51
    %67 = vmatmul.bf16.gmra.mxu0 %v57
    %v68 = vpop.f32.mrf.mxu0
    %v69 = vadd.f32 %v36, %v68
    %v70 = vpop.f32.mrf.mxu0
    %v71 = vadd.f32 %v36, %v70
    %72 = vdwg.mxu0
    %v73 = vmax.f32 %v69, 0.0
    %v74 = vmax.f32 %v71, 0.0
    %v75 = vpack.c.bf16 %v74, %v73
    %v76 = vld [vmem:[%s3] sm:$0xf]
    %v77 = vld [vmem:[%s3 + $0x4] sm:$0xf]
    %v78 = vld [vmem:[%s3 + $0x8] sm:$0xf]
    %v79 = vld [vmem:[%s3 + $0xc] sm:$0xf]
    %v80 = vld [vmem:[%s3 + $0x10] sm:$0xf]
    %v81 = vld [vmem:[%s3 + $0x14] sm:$0xf]
    %v82 = vld [vmem:[%s3 + $0x18] sm:$0xf]
    %v83 = vld [vmem:[%s3 + $0x1c] sm:$0xf]
    %v84 = vld [vmem:[%s3 + $0x20] sm:$0xf]
    %v85 = vld [vmem:[%s3 + $0x24] sm:$0xf]
    %v86 = vld [vmem:[%s3 + $0x28] sm:$0xf]
    %v87 = vld [vmem:[%s3 + $0x2c] sm:$0xf]
    %v88 = vld [vmem:[%s3 + $0x30] sm:$0xf]
    %v89 = vld [vmem:[%s3 + $0x34] sm:$0xf]
    %v90 = vld [vmem:[%s3 + $0x38] sm:$0xf]
    %v91 = vld [vmem:[%s3 + $0x3c] sm:$0xf]
    %v92 = vld [vmem:[%s4] sm:$0x1]
    %v94 = vperm.slane %v92, 0
    %v112 = vunpack.c.l.b16 %v76
    %v113 = vunpack.c.l.b16 %v77
    %v114 = vunpack.c.l.b16 %v78
    %v115 = vunpack.c.l.b16 %v79
    %v116 = vunpack.c.l.b16 %v80
    %v117 = vunpack.c.l.b16 %v81
    %v118 = vunpack.c.l.b16 %v82
    %v119 = vunpack.c.l.b16 %v83
    %v120 = vunpack.c.l.b16 %v84
    %v121 = vunpack.c.l.b16 %v85
    %v122 = vunpack.c.l.b16 %v86
    %v123 = vunpack.c.l.b16 %v87
    %v124 = vunpack.c.l.b16 %v88
    %v125 = vunpack.c.l.b16 %v89
    %v126 = vunpack.c.l.b16 %v90
    %v127 = vunpack.c.l.b16 %v91
    %v128 = vpack.c.b16 %v113, %v112
    %v129 = vpack.c.b16 %v115, %v114
    %v130 = vpack.c.b16 %v117, %v116
    %v131 = vpack.c.b16 %v119, %v118
    %v132 = vpack.c.b16 %v121, %v120
    %v133 = vpack.c.b16 %v123, %v122
    %v134 = vpack.c.b16 %v125, %v124
    %v135 = vpack.c.b16 %v127, %v126
    %144 = vmatpush.bf16.msra.mxu0 %v135
    %145 = vmatpush.bf16.msra.mxu0 %v134
    %146 = vmatpush.bf16.msra.mxu0 %v133
    %147 = vmatpush.bf16.msra.mxu0 %v132
    %148 = vmatpush.bf16.msra.mxu0 %v131
    %149 = vmatpush.bf16.msra.mxu0 %v130
    %150 = vmatpush.bf16.msra.mxu0 %v129
    %151 = vmatpush.bf16.msra.mxu0 %v128
    %152 = vmatmul.bf16.gmra.mxu0 %v75
    %v153 = vpop.f32.mrf.mxu0
    %v154 = vadd.f32 %v94, %v153
    %v155 = vpop.f32.mrf.mxu0
    %v156 = vadd.f32 %v94, %v155
    %157 = vdwg.mxu0
    %v158 = vmax.f32 %v154, 0.0
    %v159 = vmax.f32 %v156, 0.0
    %v160 = vpack.c.bf16 %v159, %v158
    %v161 = vld [vmem:[%s5] sm:$0xf]
    %v162 = vld [vmem:[%s5 + $0x4] sm:$0xf]
    %v163 = vld [vmem:[%s5 + $0x8] sm:$0xf]
    %v164 = vld [vmem:[%s5 + $0xc] sm:$0xf]
    %v165 = vld [vmem:[%s5 + $0x10] sm:$0xf]
    %v166 = vld [vmem:[%s5 + $0x14] sm:$0xf]
    %v167 = vld [vmem:[%s5 + $0x18] sm:$0xf]
    %v168 = vld [vmem:[%s5 + $0x1c] sm:$0xf]
    %v169 = vld [vmem:[%s6] sm:$0x1]
    %v171 = vperm.slane %v169, 0
    %v181 = vunpack.c.l.b16 %v161
    %v182 = vunpack.c.l.b16 %v162
    %v183 = vunpack.c.l.b16 %v163
    %v184 = vunpack.c.l.b16 %v164
    %v185 = vunpack.c.l.b16 %v165
    %v186 = vunpack.c.l.b16 %v166
    %v187 = vunpack.c.l.b16 %v167
    %v188 = vunpack.c.l.b16 %v168
    %v189 = vpack.c.b16 %v182, %v181
    %v190 = vpack.c.b16 %v184, %v183
    %v191 = vpack.c.b16 %v186, %v185
    %v192 = vpack.c.b16 %v188, %v187
    %vm197 = vcmask 523264
    %v199 = vsel %vm197, %v160, 0
    %201 = vmatpush.bf16.msra.mxu0 0
    %202 = vmatpush.bf16.msra.mxu0 0
    %203 = vmatpush.bf16.msra.mxu0 0
    %204 = vmatpush.bf16.msra.mxu0 0
    %205 = vmatpush.bf16.msra.mxu0 %v192
    %206 = vmatpush.bf16.msra.mxu0 %v191
    %207 = vmatpush.bf16.msra.mxu0 %v190
    %208 = vmatpush.bf16.msra.mxu0 %v189
    %209 = vmatmul.bf16.gmra.mxu0 %v199
    %v210 = vpop.f32.mrf.mxu0
    %v211 = vadd.f32 %v171, %v210
    %v212 = vpop.f32.mrf.mxu0
    %v213 = vadd.f32 %v171, %v212
    %214 = vdwg.mxu0
    %215 = vst [vmem:[#allocation2] sm:$0xff] %v211
    %216 = vst [vmem:[#allocation2 + $0x8] sm:$0xff] %v213
    // Predicated region
    $region30: #{tpu_custom_call.1} parent=1 // pred_check
      _
    $region31: #{tpu_custom_call.1} parent=1 // pred_check_branch
      %218 = sbr.rel (0) target = $region33
    $region32: #{tpu_custom_call.1} parent=1 // pred_region
      %220 = vsyncadd [#allocation3], 0
      %s221 = sshll.u32 [#allocation2], 4
      %s222 = int_to_ptr.vmem [resolvable:$true] %s221
      %s223 = sshll.u32 %s7, 4
      %s224 = int_to_ptr.hbm [resolvable:$true] %s223
      %229 = dma.vmem_to_hbm [thread:$0]  %s222, 256, %s224, [#allocation3], 128, 128, 8
    $region33: #{tpu_custom_call.1} parent=1 // pred_fallthru
      _
    // Predicated region
    $region34: #{tpu_custom_call.1} parent=1 // pred_check
      _
    $region35: #{tpu_custom_call.1} parent=1 // pred_check_branch
      %231 = sbr.rel (0) target = $region37
    $region36: #{tpu_custom_call.1} parent=1 // pred_region
      %233 = dma.done [#allocation3], 256
    $region37: #{tpu_custom_call.1} parent=1 // pred_fallthru
      _
    %234 = vsyncpa [#allocation3], 1

</llo_original>
